<compile_context>
chip_gen: v7x
topology: tpu7x:2x2x1
jax: 0.10.0
libtpu: 0.0.40
codegen_flags: <defaults>
</compile_context>

<pallas_src>
import numpy as np
import jax
import jax.numpy as jnp
from jax.experimental import pallas as pl
from jax.experimental.pallas import tpu as pltpu

POOL_SIZES = (1, 2, 3, 6)
KK = sum(k * k for k in POOL_SIZES)      # 50 pooled positions across all scales
KK_PAD = 128                             # lane-dense pooled axis
BN_EPS = 1e-5


# ---------------------------------------------------------------------------
# Data-independent matrices (adaptive avg-pool bins & bilinear interp weights)
# ---------------------------------------------------------------------------
def adaptive_pool_matrix(H, k):
    """A (k, H) with A[i, h] = 1/bin_size if h in bin i (PyTorch adaptive bins)."""
    A = np.zeros((k, H), np.float32)
    for i in range(k):
        s = (i * H) // k                  # floor(i*H/k)
        e = -((-(i + 1) * H) // k)        # ceil((i+1)*H/k)
        A[i, s:e] = 1.0 / float(e - s)
    return A


def bilinear_matrix(H, k):
    """B (H, k): bilinear interpolation weights, align_corners=True, k -> H."""
    B = np.zeros((H, k), np.float32)
    if k == 1 or H == 1:                  # degenerate (avoid /(H-1) == /0)
        B[:, 0] = 1.0
        return B
    scale = (k - 1) / (H - 1)
    for h in range(H):
        src = h * scale
        i0 = min(int(np.floor(src)), k - 1)
        i1 = min(i0 + 1, k - 1)
        w1 = src - i0
        B[h, i0] += 1.0 - w1
        B[h, i1] += w1
    return B


def make_matrices(H, W):
    """Fused pool / upsample operators (KK zero-padded to KK_PAD) plus the
    per-branch forms used by the pure-JAX reference."""
    HW = H * W
    Ps, Us = [], []
    for k in POOL_SIZES:
        Ah, Aw = adaptive_pool_matrix(H, k), adaptive_pool_matrix(W, k)
        Bh, Bw = bilinear_matrix(H, k), bilinear_matrix(W, k)
        Ps.append(np.kron(Ah, Aw))        # (k*k, HW)
        Us.append(np.kron(Bh, Bw))        # (HW, k*k)
    P_all = np.concatenate(Ps, axis=0)    # (KK, HW)
    U_all = np.concatenate(Us, axis=1)    # (HW, KK)

    pT = np.zeros((HW, KK_PAD), np.float32)   # zero pad columns: padded pooled
    pT[:, :KK] = P_all.T                      #   positions stay exactly zero
    uT = np.zeros((KK_PAD, HW), np.float32)   # zero pad rows: padded pooled
    uT[:KK, :] = U_all.T                      #   positions never contribute
    consts = {"pT": jnp.asarray(pT), "uT": jnp.asarray(uT)}
    return consts, [jnp.asarray(p) for p in Ps], [jnp.asarray(u) for u in Us]


def make_branch_mask(hidden):
    """Block-diagonal 0/1 mask (4*hidden, KK_PAD): branch-i rows x scale-i cols."""
    mask = np.zeros((4 * hidden, KK_PAD), np.float32)
    off = 0
    for i, k in enumerate(POOL_SIZES):
        mask[i * hidden:(i + 1) * hidden, off:off + k * k] = 1.0
        off += k * k
    return jnp.asarray(mask)


# ---------------------------------------------------------------------------
# Parameter construction (deterministic, inference BN folded into 1x1 convs)
# ---------------------------------------------------------------------------
def fold_bn(weight_oi, gamma, beta, mean, var):
    """Fold inference BN into a bias-free 1x1 conv.  weight_oi: (out, in)."""
    inv = gamma / jnp.sqrt(var + BN_EPS)
    w = weight_oi * inv[:, None]                  # (out, in)
    b = beta - mean * inv                         # (out,)
    return w.T, b[None, :]                        # (in, out), (1, out)


def init_params(key, in_channel, out_channel):
    hidden = in_channel // 4
    params = {"branch": []}
    for _ in range(4):
        key, kw, kg, kb, km, kv = jax.random.split(key, 6)
        w = jax.random.normal(kw, (hidden, in_channel), jnp.float32) * 0.1
        gamma = 1.0 + 0.1 * jax.random.normal(kg, (hidden,), jnp.float32)
        beta = 0.1 * jax.random.normal(kb, (hidden,), jnp.float32)
        mean = 0.1 * jax.random.normal(km, (hidden,), jnp.float32)
        var = jax.random.uniform(kv, (hidden,), jnp.float32, 0.5, 1.5)
        params["branch"].append(fold_bn(w, gamma, beta, mean, var))

    key, kw, kg, kb, km, kv = jax.random.split(key, 6)
    w = jax.random.normal(kw, (out_channel, 2 * in_channel), jnp.float32) * 0.1
    gamma = 1.0 + 0.1 * jax.random.normal(kg, (out_channel,), jnp.float32)
    beta = 0.1 * jax.random.normal(kb, (out_channel,), jnp.float32)
    mean = 0.1 * jax.random.normal(km, (out_channel,), jnp.float32)
    var = jax.random.uniform(kv, (out_channel,), jnp.float32, 0.5, 1.5)
    w_out, b_out = fold_bn(w, gamma, beta, mean, var)   # (2C, Cout), (1, Cout)

    # split final conv weight per concat segment: [x | feat1..feat4]
    params["wx"] = w_out[:in_channel]                                     # (C, Cout)
    params["wf"] = [w_out[in_channel + i * hidden: in_channel + (i + 1) * hidden]
                    for i in range(4)]                                    # (hidden, Cout)
    params["bout"] = b_out
    params["hidden"] = hidden
    return params


def pack_params(params):
    """Fused, transposed operands: bf16 for MXU matmuls, f32 bias/mask epilogue."""
    hidden = params["hidden"]
    w_cat = jnp.concatenate([w for w, _ in params["branch"]], axis=1)     # (C, 4h)
    b_cat = jnp.concatenate([b for _, b in params["branch"]], axis=1)     # (1, 4h)
    wf_cat = jnp.concatenate(params["wf"], axis=0)                        # (4h, Cout)
    return {
        "wcatT": w_cat.T.astype(jnp.bfloat16),        # (4h, C)
        "bcatT": b_cat.T.astype(jnp.float32),         # (4h, 1)
        "maskT": make_branch_mask(hidden),            # (4h, KK_PAD) f32
        "wfcatT": wf_cat.T.astype(jnp.bfloat16),      # (Cout, 4h)
        "wxT": params["wx"].T.astype(jnp.bfloat16),   # (Cout, C)
        "boutT": params["bout"].T.astype(jnp.float32),  # (Cout, 1)
    }


# ---------------------------------------------------------------------------
# Pallas kernels
# ---------------------------------------------------------------------------
def _pool_branch_kernel(x_ref, pT_ref, wcatT_ref, bcatT_ref, maskT_ref,
                        wfcatT_ref, z_ref, pooled_acc):
    """Phase 1: accumulate all 4 adaptive avg-pools over HW tiles; on the last
    tile apply the fused branch 1x1 conv+BN+ReLU and the branch slices of the
    final 1x1 conv at the tiny pooled (KK) scale."""
    t = pl.program_id(1)

    @pl.when(t == 0)
    def _():
        pooled_acc[...] = jnp.zeros_like(pooled_acc)

    # bf16 operands, f32 MXU accumulation
    pooled_acc[...] += jnp.dot(x_ref[0], pT_ref[...],
                               preferred_element_type=jnp.float32)   # (C, KK_PAD)

    @pl.when(t == pl.num_programs(1) - 1)
    def _():
        pooled_bf = pooled_acc[...].astype(jnp.bfloat16)
        yT = jnp.maximum(
            jnp.dot(wcatT_ref[...], pooled_bf,
                    preferred_element_type=jnp.float32) + bcatT_ref[...],
            0.0) * maskT_ref[...]                                    # (4h, KK_PAD)
        z_ref[0] = jnp.dot(wfcatT_ref[...], yT.astype(jnp.bfloat16),
                           preferred_element_type=jnp.float32)       # (Cout, KK_PAD)


def _output_kernel(x_ref, z_ref, uT_ref, wxT_ref, boutT_ref, o_ref):
    """Phase 2: out_tile = relu(Wx^T @ x_tile + zT @ U^T_tile + b)."""
    acc = jnp.dot(wxT_ref[...], x_ref[0], preferred_element_type=jnp.float32)
    acc = acc + jnp.dot(z_ref[0].astype(jnp.bfloat16), uT_ref[...],
                        preferred_element_type=jnp.float32)
    o_ref[0] = jnp.maximum(acc + boutT_ref[...], 0.0)


# ---------------------------------------------------------------------------
# Wrapper: generation-aware tiling + two pipelined pallas_calls
# ---------------------------------------------------------------------------
def _vmem_cap_bytes():
    try:
        return int(pltpu.get_tpu_info().vmem_capacity_bytes)
    except Exception:
        return 64 * 1024 * 1024


def _auto_hw_tile(HW):
    """~512-wide tiles on v7x (64 MiB VMEM), ~1024 on v5e/v6e (128 MiB)."""
    target = 512 if _vmem_cap_bytes() <= 64 * 1024 * 1024 else 1024
    hw128 = -(-HW // 128) * 128
    return min(target, hw128)


def _compiler_params(per_step_bytes):
    cap = _vmem_cap_bytes()
    # actual per-step footprint + headroom for Mosaic scratch; never the full
    # physical VMEM (esp. on v7x where 64 MiB is the whole TensorCore budget)
    limit = int(min(max(2 * per_step_bytes + (8 << 20), 32 << 20),
                    int(0.85 * cap)))
    return pltpu.CompilerParams(
        dimension_semantics=("parallel", "arbitrary"),
        vmem_limit_bytes=limit)


def pyramid_pooling(x_nchw, packed, consts, hw_tile=None):
    # TODO(synk): for production shapes (C, Cout >= 128) re-orient the KK chain
    # onto the MXU row axis ((HW, C) slabs, pooled = (KK, C)) to avoid 50->256
    # column padding; at the demo Cout=16 that layout would force masked stores.
    # TODO(synk): on single-TC chips at toy shapes, fold the batch into one grid
    # step to halve per-step overhead; grid=(N, T) kept so v7x splits N over 2 TCs.
    N, C, H, W = x_nchw.shape
    HW = H * W
    Cout = packed["wxT"].shape[0]
    h4 = packed["wcatT"].shape[0]

    if hw_tile is None:
        hw_tile = _auto_hw_tile(HW)
    assert hw_tile % 128 == 0, "HW tile must be lane-dense (multiple of 128)"
    HW_pad = -(-HW // hw_tile) * hw_tile
    T = HW_pad // hw_tile

    # zero-pad HW to a tile multiple; pool matrix gets zero ROWS and upsample
    # matrix zero COLUMNS at pad positions, so bin averages are unchanged.
    x_flat = x_nchw.reshape(N, C, HW).astype(jnp.bfloat16)
    x_flat = jnp.pad(x_flat, ((0, 0), (0, 0), (0, HW_pad - HW)))
    pT = jnp.pad(consts["pT"], ((0, HW_pad - HW), (0, 0))).astype(jnp.bfloat16)
    uT = jnp.pad(consts["uT"], ((0, 0), (0, HW_pad - HW))).astype(jnp.bfloat16)

    # ---- phase 1: pooled accumulation + branch convs -> zT (N, Cout, KK_PAD)
    w_bytes1 = 2 * (h4 * C + Cout * h4) + 4 * (h4 + h4 * KK_PAD)
    step1_bytes = (2 * 2 * C * hw_tile            # x tile (bf16, double-buffered)
                   + 2 * 2 * hw_tile * KK_PAD     # pT tile
                   + 2 * w_bytes1                 # resident weights
                   + 4 * C * KK_PAD               # f32 accumulator scratch
                   + 2 * 4 * Cout * KK_PAD)       # zT output
    z = pl.pallas_call(
        _pool_branch_kernel,
        out_shape=jax.ShapeDtypeStruct((N, Cout, KK_PAD), jnp.float32),
        grid=(N, T),
        in_specs=[
            pl.BlockSpec((1, C, hw_tile), lambda n, t: (n, 0, t)),
            pl.BlockSpec((hw_tile, KK_PAD), lambda n, t: (t, 0)),
            pl.BlockSpec(packed["wcatT"].shape, lambda n, t: (0, 0)),
            pl.BlockSpec(packed["bcatT"].shape, lambda n, t: (0, 0)),
            pl.BlockSpec(packed["maskT"].shape, lambda n, t: (0, 0)),
            pl.BlockSpec(packed["wfcatT"].shape, lambda n, t: (0, 0)),
        ],
        out_specs=pl.BlockSpec((1, Cout, KK_PAD), lambda n, t: (n, 0, 0)),
        scratch_shapes=[pltpu.VMEM((C, KK_PAD), jnp.float32)],
        compiler_params=_compiler_params(step1_bytes),
        cost_estimate=pl.CostEstimate(
            flops=int(2 * N * (C * HW_pad * KK_PAD
                               + h4 * C * KK_PAD + Cout * h4 * KK_PAD)),
            transcendentals=0,
            bytes_accessed=int(2 * N * C * HW_pad + 2 * HW_pad * KK_PAD
                               + w_bytes1 + 4 * N * Cout * KK_PAD)),
    )(x_flat, pT, packed["wcatT"], packed["bcatT"], packed["maskT"],
      packed["wfcatT"])

    # ---- phase 2: stream x tiles again, fuse direct path + bilinear upsample
    w_bytes2 = 2 * Cout * C + 4 * Cout
    step2_bytes = (2 * 2 * C * hw_tile
                   + 2 * 2 * KK_PAD * hw_tile
                   + 2 * 4 * Cout * KK_PAD
                   + 2 * w_bytes2
                   + 2 * 4 * Cout * hw_tile)
    out = pl.pallas_call(
        _output_kernel,
        out_shape=jax.ShapeDtypeStruct((N, Cout, HW_pad), jnp.float32),
        grid=(N, T),
        in_specs=[
            pl.BlockSpec((1, C, hw_tile), lambda n, t: (n, 0, t)),
            pl.BlockSpec((1, Cout, KK_PAD), lambda n, t: (n, 0, 0)),
            pl.BlockSpec((KK_PAD, hw_tile), lambda n, t: (0, t)),
            pl.BlockSpec(packed["wxT"].shape, lambda n, t: (0, 0)),
            pl.BlockSpec(packed["boutT"].shape, lambda n, t: (0, 0)),
        ],
        out_specs=pl.BlockSpec((1, Cout, hw_tile), lambda n, t: (n, 0, t)),
        compiler_params=_compiler_params(step2_bytes),
        cost_estimate=pl.CostEstimate(
            flops=int(2 * N * HW_pad * (Cout * C + Cout * KK_PAD)),
            transcendentals=0,
            bytes_accessed=int(2 * N * C * HW_pad + 2 * KK_PAD * HW_pad
                               + 4 * N * Cout * KK_PAD + w_bytes2
                               + 4 * N * Cout * HW_pad)),
    )(x_flat, z, uT, packed["wxT"], packed["boutT"])

    return out[:, :, :HW].reshape(N, Cout, H, W)


# ---------------------------------------------------------------------------
# Pure-JAX reference (original per-branch, unfused f32 math) for sanity check
# ---------------------------------------------------------------------------
def reference(x_nchw, params, Ps, Us):
    N, C, H, W = x_nchw.shape
    x = x_nchw.reshape(N, C, H * W).transpose(0, 2, 1)          # (N, HW, C)
    acc = jnp.einsum("npc,co->npo", x, params["wx"])
    for i in range(4):
        W_i, B_i = params["branch"][i]
        pooled = jnp.einsum("kp,npc->nkc", Ps[i], x)
        y = jnp.maximum(jnp.einsum("nkc,ch->nkh", pooled, W_i) + B_i, 0.0)
        feat = jnp.einsum("pk,nkh->nph", Us[i], y)
        acc = acc + jnp.einsum("nph,ho->npo", feat, params["wf"][i])
    out = jnp.maximum(acc + params["bout"], 0.0)                # (N, HW, Cout)
    return out.transpose(0, 2, 1).reshape(N, -1, H, W)          # NCHW


if __name__ == "__main__":
    N, C, H, W = 2, 16, 16, 16
    out_channel = 16

    key = jax.random.PRNGKey(0)
    key, kx = jax.random.split(key)
    x = jax.random.normal(kx, (N, C, H, W), jnp.float32)        # layout: NCHW

    params = init_params(key, C, out_channel)
    packed = pack_params(params)
    consts, Ps, Us = make_matrices(H, W)

    ref = jax.block_until_ready(reference(x, params, Ps, Us))

    # multi-tile run exercises the two-phase pooled accumulation (T=2)...
    out_tiled = jax.block_until_ready(
        pyramid_pooling(x, packed, consts, hw_tile=128))
    # ...and the generation-auto tile path (single tile at this toy HW=256)
    out_auto = jax.block_until_ready(pyramid_pooling(x, packed, consts))

    assert out_tiled.shape == (N, out_channel, H, W), out_tiled.shape
    assert out_auto.shape == (N, out_channel, H, W), out_auto.shape
    # bf16 MXU operands with f32 accumulation -> loosened tolerance
    np.testing.assert_allclose(np.asarray(out_tiled), np.asarray(ref),
                               rtol=2e-2, atol=2e-2)
    np.testing.assert_allclose(np.asarray(out_auto), np.asarray(ref),
                               rtol=2e-2, atol=2e-2)

    print("KERNEL_OK")
</pallas_src>

<mosaic_0001>
module attributes {stable_mosaic.version = 11 : i64} {
  func.func @_pool_branch_kernel(%arg0: i32, %arg1: i32, %arg2: memref<1x16x128xbf16, #tpu.memory_space<vmem>>, %arg3: memref<128x128xbf16, #tpu.memory_space<vmem>>, %arg4: memref<16x16xbf16, #tpu.memory_space<vmem>>, %arg5: memref<16x1xf32, #tpu.memory_space<vmem>>, %arg6: memref<16x128xf32, #tpu.memory_space<vmem>>, %arg7: memref<16x16xbf16, #tpu.memory_space<vmem>>, %arg8: memref<1x16x128xf32, #tpu.memory_space<vmem>>, %arg9: memref<16x128xf32, #tpu.memory_space<vmem>>) attributes {dimension_semantics = [#tpu.dimension_semantics<parallel>, #tpu.dimension_semantics<arbitrary>], iteration_bounds = array<i64: 2, 2>, scalar_prefetch = 0 : i64, scratch_operands = 1 : i64, tpu.core_type = #tpu.core_type<tc>, window_params = [{transform_indices = @transform_0, window_bounds = array<i64: 1, 16, 128>}, {transform_indices = @transform_1, window_bounds = array<i64: 128, 128>}, {pipeline_mode = #tpu.pipeline_mode<synchronous>, transform_indices = @transform_2, window_bounds = array<i64: 16, 16>}, {pipeline_mode = #tpu.pipeline_mode<synchronous>, transform_indices = @transform_3, window_bounds = array<i64: 16, 1>}, {pipeline_mode = #tpu.pipeline_mode<synchronous>, transform_indices = @transform_4, window_bounds = array<i64: 16, 128>}, {pipeline_mode = #tpu.pipeline_mode<synchronous>, transform_indices = @transform_5, window_bounds = array<i64: 16, 16>}, {transform_indices = @transform_6, window_bounds = array<i64: 1, 16, 128>}]} {
    %c0_i32 = arith.constant 0 : i32
    %0 = arith.cmpi eq, %arg1, %c0_i32 : i32
    %1 = arith.extui %0 : i1 to i32
    %c0_i32_0 = arith.constant 0 : i32
    %2 = arith.cmpi ne, %1, %c0_i32_0 : i32
    scf.if %2 {
      %cst_10 = arith.constant 0.000000e+00 : f32
      %13 = vector.broadcast %cst_10 : f32 to vector<16x128xf32>
      %c0_11 = arith.constant 0 : index
      %c0_12 = arith.constant 0 : index
      %14 = vector.load %arg9[%c0_11, %c0_12] : memref<16x128xf32, #tpu.memory_space<vmem>>, vector<16x128xf32>
      tpu.vector_store %arg9[%c0_11, %c0_12], %13 {strides = array<i32>} : memref<16x128xf32, #tpu.memory_space<vmem>>, vector<16x128xf32>,
    } else {
    }
    %c0 = arith.constant 0 : index
    %c0_1 = arith.constant 0 : index
    %3 = vector.load %arg9[%c0, %c0_1] : memref<16x128xf32, #tpu.memory_space<vmem>>, vector<16x128xf32>
    %c0_2 = arith.constant 0 : index
    %c0_3 = arith.constant 0 : index
    %c0_4 = arith.constant 0 : index
    %4 = vector.load %arg2[%c0_2, %c0_3, %c0_4] : memref<1x16x128xbf16, #tpu.memory_space<vmem>>, vector<1x16x128xbf16>
    %5 = vector.shape_cast %4 : vector<1x16x128xbf16> to vector<16x128xbf16>
    %c0_5 = arith.constant 0 : index
    %c0_6 = arith.constant 0 : index
    %6 = vector.load %arg3[%c0_5, %c0_6] : memref<128x128xbf16, #tpu.memory_space<vmem>>, vector<128x128xbf16>
    %cst = arith.constant dense<0.000000e+00> : vector<16x128xf32>
    %7 = tpu.matmul %5, %6, %cst {dimension_numbers = #tpu.dot_dimension_numbers<[1], [0], [0], [1], [0, 0, 1, 1], [], []>} : vector<16x128xbf16>, vector<128x128xbf16>, vector<16x128xf32> -> vector<16x128xf32>
    %8 = arith.addf %3, %7 : vector<16x128xf32>
    %c0_7 = arith.constant 0 : index
    %c0_8 = arith.constant 0 : index
    %9 = vector.load %arg9[%c0_7, %c0_8] : memref<16x128xf32, #tpu.memory_space<vmem>>, vector<16x128xf32>
    tpu.vector_store %arg9[%c0_7, %c0_8], %8 {strides = array<i32>} : memref<16x128xf32, #tpu.memory_space<vmem>>, vector<16x128xf32>,
    %c1_i32 = arith.constant 1 : i32
    %10 = arith.cmpi eq, %arg1, %c1_i32 : i32
    %11 = arith.extui %10 : i1 to i32
    %c0_i32_9 = arith.constant 0 : i32
    %12 = arith.cmpi ne, %11, %c0_i32_9 : i32
    scf.if %12 {
      %c0_10 = arith.constant 0 : index
      %c0_11 = arith.constant 0 : index
      %13 = vector.load %arg9[%c0_10, %c0_11] : memref<16x128xf32, #tpu.memory_space<vmem>>, vector<16x128xf32>
      %14 = arith.truncf %13 : vector<16x128xf32> to vector<16x128xbf16>
      %c0_12 = arith.constant 0 : index
      %c0_13 = arith.constant 0 : index
      %15 = vector.load %arg4[%c0_12, %c0_13] : memref<16x16xbf16, #tpu.memory_space<vmem>>, vector<16x16xbf16>
      %cst_14 = arith.constant dense<0.000000e+00> : vector<16x128xf32>
      %16 = tpu.matmul %15, %14, %cst_14 {dimension_numbers = #tpu.dot_dimension_numbers<[1], [0], [0], [1], [0, 0, 1, 1], [], []>} : vector<16x16xbf16>, vector<16x128xbf16>, vector<16x128xf32> -> vector<16x128xf32>
      %c0_15 = arith.constant 0 : index
      %c0_16 = arith.constant 0 : index
      %17 = vector.load %arg5[%c0_15, %c0_16] : memref<16x1xf32, #tpu.memory_space<vmem>>, vector<16x1xf32>
      %18 = vector.broadcast %17 : vector<16x1xf32> to vector<16x128xf32>
      %19 = arith.addf %16, %18 : vector<16x128xf32>
      %cst_17 = arith.constant 0.000000e+00 : f32
      %20 = vector.broadcast %cst_17 : f32 to vector<16x128xf32>
      %21 = arith.maximumf %19, %20 : vector<16x128xf32>
      %c0_18 = arith.constant 0 : index
      %c0_19 = arith.constant 0 : index
      %22 = vector.load %arg6[%c0_18, %c0_19] : memref<16x128xf32, #tpu.memory_space<vmem>>, vector<16x128xf32>
      %23 = arith.mulf %21, %22 : vector<16x128xf32>
      %c0_20 = arith.constant 0 : index
      %c0_21 = arith.constant 0 : index
      %24 = vector.load %arg7[%c0_20, %c0_21] : memref<16x16xbf16, #tpu.memory_space<vmem>>, vector<16x16xbf16>
      %25 = arith.truncf %23 : vector<16x128xf32> to vector<16x128xbf16>
      %cst_22 = arith.constant dense<0.000000e+00> : vector<16x128xf32>
      %26 = tpu.matmul %24, %25, %cst_22 {dimension_numbers = #tpu.dot_dimension_numbers<[1], [0], [0], [1], [0, 0, 1, 1], [], []>} : vector<16x16xbf16>, vector<16x128xbf16>, vector<16x128xf32> -> vector<16x128xf32>
      %c0_23 = arith.constant 0 : index
      %c0_24 = arith.constant 0 : index
      %c0_25 = arith.constant 0 : index
      %27 = vector.load %arg8[%c0_23, %c0_24, %c0_25] : memref<1x16x128xf32, #tpu.memory_space<vmem>>, vector<1x16x128xf32>
      %28 = vector.shape_cast %27 : vector<1x16x128xf32> to vector<16x128xf32>
      %29 = vector.shape_cast %26 : vector<16x128xf32> to vector<1x16x128xf32>
      tpu.vector_store %arg8[%c0_23, %c0_24, %c0_25], %29 {strides = array<i32>} : memref<1x16x128xf32, #tpu.memory_space<vmem>>, vector<1x16x128xf32>,
    } else {
    }
    return
  }
  func.func @transform_0(%arg0: i32, %arg1: i32) -> (i32, i32, i32) {
    %c0_i32 = arith.constant 0 : i32
    %c0_i32_0 = arith.constant 0 : i32
    return %arg0, %c0_i32, %arg1 : i32, i32, i32
  }
  func.func @transform_1(%arg0: i32, %arg1: i32) -> (i32, i32) {
    %c0_i32 = arith.constant 0 : i32
    %c0_i32_0 = arith.constant 0 : i32
    return %arg1, %c0_i32 : i32, i32
  }
  func.func @transform_2(%arg0: i32, %arg1: i32) -> (i32, i32) {
    %c0_i32 = arith.constant 0 : i32
    %c0_i32_0 = arith.constant 0 : i32
    %c0_i32_1 = arith.constant 0 : i32
    return %c0_i32, %c0_i32_0 : i32, i32
  }
  func.func @transform_3(%arg0: i32, %arg1: i32) -> (i32, i32) {
    %c0_i32 = arith.constant 0 : i32
    %c0_i32_0 = arith.constant 0 : i32
    %c0_i32_1 = arith.constant 0 : i32
    return %c0_i32, %c0_i32_0 : i32, i32
  }
  func.func @transform_4(%arg0: i32, %arg1: i32) -> (i32, i32) {
    %c0_i32 = arith.constant 0 : i32
    %c0_i32_0 = arith.constant 0 : i32
    %c0_i32_1 = arith.constant 0 : i32
    return %c0_i32, %c0_i32_0 : i32, i32
  }
  func.func @transform_5(%arg0: i32, %arg1: i32) -> (i32, i32) {
    %c0_i32 = arith.constant 0 : i32
    %c0_i32_0 = arith.constant 0 : i32
    %c0_i32_1 = arith.constant 0 : i32
    return %c0_i32, %c0_i32_0 : i32, i32
  }
  func.func @transform_6(%arg0: i32, %arg1: i32) -> (i32, i32, i32) {
    %c0_i32 = arith.constant 0 : i32
    %c0_i32_0 = arith.constant 0 : i32
    %c0_i32_1 = arith.constant 0 : i32
    return %arg0, %c0_i32, %c0_i32_0 : i32, i32, i32
  }
}

</mosaic_0001>

<llo_original>
// kernel: tpu_custom_call.1
$region0: #{tpu_custom_call.1}
  #allocation0 [shape = 'u32[]', space=smem, size = 0x4, offset = 0x4, fixed_abs, tag = 'smem constant byte address 0x4 - core index']
  #allocation1 [shape = 'u32[144,128]{1,0:T(1,128)}', space=vmem, size = 0x12000, scoped, tag = 'internal scratch']
  #allocation2 [shape = 'f32[16,128]{1,0:T(8,128)}', space=vmem, size = 0x2000, scoped, tag = 'scratch operand']
  %s0 = inlined_call_operand.hbm [shape: bf16[2,16,256], index: 0, kind: input, shape index: {}]
  %s1 = inlined_call_operand.hbm [shape: bf16[256,128], index: 1, kind: input, shape index: {}]
  %s2 = inlined_call_operand.vmem [shape: bf16[16,16], index: 2, kind: input, shape index: {}]
  %s3 = inlined_call_operand.vmem [shape: f32[16,1], index: 3, kind: input, shape index: {}]
  %s4 = inlined_call_operand.vmem [shape: f32[16,128], index: 4, kind: input, shape index: {}]
  %s5 = inlined_call_operand.vmem [shape: bf16[16,16], index: 5, kind: input, shape index: {}]
  %s6 = inlined_call_operand.hbm [shape: f32[2,16,128], index: 6, kind: output, shape index: {}]
  %s7 = sld [smem:[#allocation0]]
  $region73: #{tpu_custom_call.1} parent=0
    _
  %s9 = ssub.s32 1, %s7
  %s10 = scalar_select 0, %s9, %s7
  $region1: #{tpu_custom_call.1} parent=0
    #allocation3 [shape = 'u8[8192]{0}', space=vmem, size = 0x2000, scoped, tag = 'input window, operand 0']
    #allocation4 [shape = 's32[2]{0}', space=sflag, size = 0x8, scoped, tag = 'scoped memory for tpu_custom_call.1']
    #allocation5 [shape = 's32[2]{0}', space=sflag, size = 0x8, scoped, tag = 'scoped memory for tpu_custom_call.1']
    #allocation6 [shape = 'u8[65536]{0}', space=vmem, size = 0x10000, scoped, tag = 'input window, operand 1']
    #allocation7 [shape = 's32[2]{0}', space=sflag, size = 0x8, scoped, tag = 'scoped memory for tpu_custom_call.1']
    #allocation8 [shape = 'u8[16384]{0}', space=vmem, size = 0x4000, scoped, tag = 'output window, operand 0']
    %11 = vsyncpa [#allocation4], 0
    %s12 = scalar_lea.sflag [#allocation4], 1
    %13 = vsyncpa %s12, 0
    %14 = vsyncpa [#allocation7], 0
    %s15 = scalar_lea.sflag [#allocation7], 1
    %16 = vsyncpa %s15, 0
    %17 = vsyncpa [#allocation5], 0
    %s18 = scalar_lea.sflag [#allocation5], 1
    %19 = vsyncpa %s18, 0
    loop: start=0, step=1, limit=6
    $region2: #{tpu_custom_call.1} parent=1 // loop_pre_header
      _
    $region3: #{tpu_custom_call.1} parent=1 // loop_header
      %s21 = sphi 0, %s25
      %p22 = scmp.ge.s32.totalorder %s21, 6
      %s28 = sphi 0, %s40
      %s29 = sphi 0, %s36
      %s30 = sphi 0, %s28
      %s31 = sphi 0, %s29
      %s32 = sphi 0, %s30
      %s33 = sphi 0, %s31
      %s45 = sphi 0, %s47
      %s48 = sphi 0, %s45
      %s49 = sphi 0, %s48
      %s65 = sphi 0, %s49
      %s71 = sphi 0, %s73
      %s74 = sphi 0, %s71
      %s75 = sphi 0, %s74
      %s91 = sphi 0, %s75
      %s95 = sphi 0, %s95
      %s97 = sphi 0, %s95
      %s98 = sphi 0, %s97
      %s112 = sphi 0, %s98
      %s116 = sphi 0, %s116
      %s118 = sphi 0, %s116
      %s119 = sphi 0, %s118
      %s133 = sphi 0, %s119
      %s137 = sphi 0, %s137
      %s139 = sphi 0, %s137
      %s140 = sphi 0, %s139
      %s154 = sphi 0, %s140
      %s158 = sphi 0, %s158
      %s160 = sphi 0, %s158
      %s161 = sphi 0, %s160
      %s175 = sphi 0, %s161
      %s181 = sphi 0, %s183
      %s184 = sphi 0, %s181
      %s185 = sphi 0, %s184
      %s201 = sphi 0, %s185
    $region4: #{tpu_custom_call.1} parent=1 // loop_header_branch
      %24 = sbr.rel (%p22) target = $region8
    $region5: #{tpu_custom_call.1} parent=1 // loop_body
      %s26 = ssub.s32 %s21, 1
      %s27 = ssub.s32 %s21, 2
      %s34 = sadd.s32 1, %s29
      %p35 = scmp.ge.s32.totalorder %s34, 2
      %s36 = scalar_select %p35, 0, %s34
      %s37 = sadd.s32 1, %s28
      %s38 = scalar_select %p35, %s37, %s28
      %p39 = scmp.ge.s32.totalorder %s38, 2
      %s40 = scalar_select %p39, 0, %s38
      %s41 = ssub.s32 %s28, %s40
      %s42 = ssub.s32 %s29, %s36
      %s43 = sor.u32 %s41, %s42
      %p44 = scmp.eq.s32.totalorder %s43, 0
      %s46 = sadd.s32 %s45, 1
      %s47 = scalar_select %p44, %s45, %s46
      %p50 = pneg %p44
      %p51 = scmp.eq.s32.totalorder %s21, 3
      %p52 = por %p50, %p51
      %p53 = scmp.ne.s32.totalorder %s45, %s48
      %p54 = scmp.eq.s32.totalorder %s21, 0
      %p55 = por %p53, %p54
      %p56 = scmp.ne.s32.totalorder %s45, %s48
      %p57 = scmp.eq.s32.totalorder %s26, 3
      %p58 = por %p56, %p57
      %p59 = scmp.ne.s32.totalorder %s48, %s49
      %p60 = scmp.eq.s32.totalorder %s26, 0
      %p61 = por %p59, %p60
      %p62 = scmp.ne.s32.totalorder %s48, %s49
      %p63 = scmp.eq.s32.totalorder %s27, 3
      %p64 = por %p62, %p63
      %p66 = scmp.ne.s32.totalorder %s49, %s65
      %p67 = scmp.eq.s32.totalorder %s27, 0
      %p68 = por %p66, %p67
      %s69 = ssub.s32 %s29, %s36
      %p70 = scmp.eq.s32.totalorder %s69, 0
      %s72 = sadd.s32 %s71, 1
      %s73 = scalar_select %p70, %s71, %s72
      %p76 = pneg %p70
      %p77 = scmp.eq.s32.totalorder %s21, 3
      %p78 = por %p76, %p77
      %p79 = scmp.ne.s32.totalorder %s71, %s74
      %p80 = scmp.eq.s32.totalorder %s21, 0
      %p81 = por %p79, %p80
      %p82 = scmp.ne.s32.totalorder %s71, %s74
      %p83 = scmp.eq.s32.totalorder %s26, 3
      %p84 = por %p82, %p83
      %p85 = scmp.ne.s32.totalorder %s74, %s75
      %p86 = scmp.eq.s32.totalorder %s26, 0
      %p87 = por %p85, %p86
      %p88 = scmp.ne.s32.totalorder %s74, %s75
      %p89 = scmp.eq.s32.totalorder %s27, 3
      %p90 = por %p88, %p89
      %p92 = scmp.ne.s32.totalorder %s75, %s91
      %p93 = scmp.eq.s32.totalorder %s27, 0
      %p94 = por %p92, %p93
      %s96 = sadd.s32 %s95, 1
      %p99 = scmp.eq.s32.totalorder %s21, 3
      %p100 = scmp.ne.s32.totalorder %s95, %s97
      %p101 = scmp.eq.s32.totalorder %s21, 0
      %p102 = por %p100, %p101
      %p103 = scmp.ne.s32.totalorder %s95, %s97
      %p104 = scmp.eq.s32.totalorder %s26, 3
      %p105 = por %p103, %p104
      %p106 = scmp.ne.s32.totalorder %s97, %s98
      %p107 = scmp.eq.s32.totalorder %s26, 0
      %p108 = por %p106, %p107
      %p109 = scmp.ne.s32.totalorder %s97, %s98
      %p110 = scmp.eq.s32.totalorder %s27, 3
      %p111 = por %p109, %p110
      %p113 = scmp.ne.s32.totalorder %s98, %s112
      %p114 = scmp.eq.s32.totalorder %s27, 0
      %p115 = por %p113, %p114
      %s117 = sadd.s32 %s116, 1
      %p120 = scmp.eq.s32.totalorder %s21, 3
      %p121 = scmp.ne.s32.totalorder %s116, %s118
      %p122 = scmp.eq.s32.totalorder %s21, 0
      %p123 = por %p121, %p122
      %p124 = scmp.ne.s32.totalorder %s116, %s118
      %p125 = scmp.eq.s32.totalorder %s26, 3
      %p126 = por %p124, %p125
      %p127 = scmp.ne.s32.totalorder %s118, %s119
      %p128 = scmp.eq.s32.totalorder %s26, 0
      %p129 = por %p127, %p128
      %p130 = scmp.ne.s32.totalorder %s118, %s119
      %p131 = scmp.eq.s32.totalorder %s27, 3
      %p132 = por %p130, %p131
      %p134 = scmp.ne.s32.totalorder %s119, %s133
      %p135 = scmp.eq.s32.totalorder %s27, 0
      %p136 = por %p134, %p135
      %s138 = sadd.s32 %s137, 1
      %p141 = scmp.eq.s32.totalorder %s21, 3
      %p142 = scmp.ne.s32.totalorder %s137, %s139
      %p143 = scmp.eq.s32.totalorder %s21, 0
      %p144 = por %p142, %p143
      %p145 = scmp.ne.s32.totalorder %s137, %s139
      %p146 = scmp.eq.s32.totalorder %s26, 3
      %p147 = por %p145, %p146
      %p148 = scmp.ne.s32.totalorder %s139, %s140
      %p149 = scmp.eq.s32.totalorder %s26, 0
      %p150 = por %p148, %p149
      %p151 = scmp.ne.s32.totalorder %s139, %s140
      %p152 = scmp.eq.s32.totalorder %s27, 3
      %p153 = por %p151, %p152
      %p155 = scmp.ne.s32.totalorder %s140, %s154
      %p156 = scmp.eq.s32.totalorder %s27, 0
      %p157 = por %p155, %p156
      %s159 = sadd.s32 %s158, 1
      %p162 = scmp.eq.s32.totalorder %s21, 3
      %p163 = scmp.ne.s32.totalorder %s158, %s160
      %p164 = scmp.eq.s32.totalorder %s21, 0
      %p165 = por %p163, %p164
      %p166 = scmp.ne.s32.totalorder %s158, %s160
      %p167 = scmp.eq.s32.totalorder %s26, 3
      %p168 = por %p166, %p167
      %p169 = scmp.ne.s32.totalorder %s160, %s161
      %p170 = scmp.eq.s32.totalorder %s26, 0
      %p171 = por %p169, %p170
      %p172 = scmp.ne.s32.totalorder %s160, %s161
      %p173 = scmp.eq.s32.totalorder %s27, 3
      %p174 = por %p172, %p173
      %p176 = scmp.ne.s32.totalorder %s161, %s175
      %p177 = scmp.eq.s32.totalorder %s27, 0
      %p178 = por %p176, %p177
      %s179 = ssub.s32 %s28, %s40
      %p180 = scmp.eq.s32.totalorder %s179, 0
      %s182 = sadd.s32 %s181, 1
      %s183 = scalar_select %p180, %s181, %s182
      %p186 = pneg %p180
      %p187 = scmp.eq.s32.totalorder %s21, 3
      %p188 = por %p186, %p187
      %p189 = scmp.ne.s32.totalorder %s181, %s184
      %p190 = scmp.eq.s32.totalorder %s21, 0
      %p191 = por %p189, %p190
      %p192 = scmp.ne.s32.totalorder %s181, %s184
      %p193 = scmp.eq.s32.totalorder %s26, 3
      %p194 = por %p192, %p193
      %p195 = scmp.ne.s32.totalorder %s184, %s185
      %p196 = scmp.eq.s32.totalorder %s26, 0
      %p197 = por %p195, %p196
      %p198 = scmp.ne.s32.totalorder %s184, %s185
      %p199 = scmp.eq.s32.totalorder %s27, 3
      %p200 = por %p198, %p199
      %p202 = scmp.ne.s32.totalorder %s185, %s201
      %p203 = scmp.eq.s32.totalorder %s27, 0
      %p204 = por %p202, %p203
      %p205 = scmp.le.s32.totalorder 1, %s21
      %p206 = scmp.lt.s32.totalorder %s21, 5
      %p207 = pnand %p205, %p206
      %p208 = pneg %p207
      // Predicated region
      $region9: #{tpu_custom_call.1} parent=5 // pred_check
        _
      $region10: #{tpu_custom_call.1} parent=5 // pred_check_branch
        %210 = sbr.rel (%p207) target = $region12
      $region11: #{tpu_custom_call.1} parent=5 // pred_region
        %s211 = ssub.s32 %s21, 1
        // Predicated region
        $region13: #{tpu_custom_call.1} parent=11 // pred_check
          %p212 = pneg %p108
        $region14: #{tpu_custom_call.1} parent=11 // pred_check_branch
          %214 = sbr.rel (%p212) target = $region16
        $region15: #{tpu_custom_call.1} parent=11 // pred_region
          _
        $region16: #{tpu_custom_call.1} parent=11 // pred_fallthru
          _
        // Predicated region
        $region17: #{tpu_custom_call.1} parent=11 // pred_check
          %p215 = pneg %p129
        $region18: #{tpu_custom_call.1} parent=11 // pred_check_branch
          %217 = sbr.rel (%p215) target = $region20
        $region19: #{tpu_custom_call.1} parent=11 // pred_region
          _
        $region20: #{tpu_custom_call.1} parent=11 // pred_fallthru
          _
        // Predicated region
        $region21: #{tpu_custom_call.1} parent=11 // pred_check
          %p218 = pneg %p150
        $region22: #{tpu_custom_call.1} parent=11 // pred_check_branch
          %220 = sbr.rel (%p218) target = $region24
        $region23: #{tpu_custom_call.1} parent=11 // pred_region
          _
        $region24: #{tpu_custom_call.1} parent=11 // pred_fallthru
          _
        // Predicated region
        $region25: #{tpu_custom_call.1} parent=11 // pred_check
          %p221 = pneg %p171
        $region26: #{tpu_custom_call.1} parent=11 // pred_check_branch
          %223 = sbr.rel (%p221) target = $region28
        $region27: #{tpu_custom_call.1} parent=11 // pred_region
          _
        $region28: #{tpu_custom_call.1} parent=11 // pred_fallthru
          _
      $region12: #{tpu_custom_call.1} parent=5 // pred_fallthru
        _
      %p224 = scmp.lt.s32.totalorder %s21, 4
      // Predicated region
      $region29: #{tpu_custom_call.1} parent=5 // pred_check
        %p225 = pneg %p224
      $region30: #{tpu_custom_call.1} parent=5 // pred_check_branch
        %227 = sbr.rel (%p225) target = $region32
      $region31: #{tpu_custom_call.1} parent=5 // pred_region
        // Predicated region
        $region33: #{tpu_custom_call.1} parent=31 // pred_check
          %p228 = pneg %p55
        $region34: #{tpu_custom_call.1} parent=31 // pred_check_branch
          %230 = sbr.rel (%p228) target = $region36
        $region35: #{tpu_custom_call.1} parent=31 // pred_region
          %s231 = sand.u32 %s45, 1
          %s232 = scalar_lea.sflag [#allocation4], %s231
          %s233 = sand.u32 %s45, 1
          %s234 = smul.addr %s233, 8
          %s235 = scalar_lea.vmem [#allocation3], %s234
          %s237 = ssub.s32 128, 128
          %238 = vsyncadd %s232, %s237
          %s239 = smul.addr %s28, 4
          %s240 = sadd.s32 %s29, %s239
          %s241 = smul.addr %s240, 64
          %s242 = scalar_lea.hbm %s0, %s241
          %s243 = sshll.u32 %s235, 4
          %s244 = int_to_ptr.vmem [resolvable:$true] %s243
          %249 = dma.hbm_to_vmem [thread:$0]  %s242, 128, %s244, %s232, 128, 64, 4
        $region36: #{tpu_custom_call.1} parent=31 // pred_fallthru
          _
        // Predicated region
        $region37: #{tpu_custom_call.1} parent=31 // pred_check
          %p250 = pneg %p81
        $region38: #{tpu_custom_call.1} parent=31 // pred_check_branch
          %252 = sbr.rel (%p250) target = $region40
        $region39: #{tpu_custom_call.1} parent=31 // pred_region
          %s253 = sand.u32 %s71, 1
          %s254 = scalar_lea.sflag [#allocation7], %s253
          %s255 = sand.u32 %s71, 1
          %s256 = smul.addr %s255, 64
          %s257 = scalar_lea.vmem [#allocation6], %s256
          %s258 = smul.u32 16, %s29
          %s260 = ssub.s32 1024, 1024
          %261 = vsyncadd %s254, %s260
          %s262 = smul.addr %s258, 64
          %s263 = scalar_lea.hbm %s1, %s262
          %s264 = sshll.u32 %s257, 4
          %s265 = int_to_ptr.vmem [resolvable:$true] %s264
          %270 = dma.hbm_to_vmem [thread:$0]  %s263, 1024, %s265, %s254, 64, 64, 4
        $region40: #{tpu_custom_call.1} parent=31 // pred_fallthru
          _
      $region32: #{tpu_custom_call.1} parent=5 // pred_fallthru
        _
      %p271 = scmp.le.s32.totalorder 1, %s21
      %p272 = scmp.lt.s32.totalorder %s21, 5
      %p273 = pnand %p271, %p272
      %p274 = pneg %p273
      // Predicated region
      $region41: #{tpu_custom_call.1} parent=5 // pred_check
        _
      $region42: #{tpu_custom_call.1} parent=5 // pred_check_branch
        %276 = sbr.rel (%p273) target = $region44
      $region43: #{tpu_custom_call.1} parent=5 // pred_region
        %s277 = ssub.s32 %s21, 1
        %s278 = sand.u32 %s48, 1
        %s279 = scalar_lea.sflag [#allocation4], %s278
        %s280 = sand.u32 %s48, 1
        %s281 = smul.addr %s280, 8
        %s282 = scalar_lea.vmem [#allocation3], %s281
        // Predicated region
        $region45: #{tpu_custom_call.1} parent=43 // pred_check
          %p283 = pneg %p61
        $region46: #{tpu_custom_call.1} parent=43 // pred_check_branch
          %285 = sbr.rel (%p283) target = $region48
        $region47: #{tpu_custom_call.1} parent=43 // pred_region
          %286 = dma.done %s279, 128
        $region48: #{tpu_custom_call.1} parent=43 // pred_fallthru
          _
        %s287 = sand.u32 %s74, 1
        %s288 = scalar_lea.sflag [#allocation7], %s287
        %s289 = sand.u32 %s74, 1
        %s290 = smul.addr %s289, 64
        %s291 = scalar_lea.vmem [#allocation6], %s290
        // Predicated region
        $region49: #{tpu_custom_call.1} parent=43 // pred_check
          %p292 = pneg %p87
        $region50: #{tpu_custom_call.1} parent=43 // pred_check_branch
          %294 = sbr.rel (%p292) target = $region52
        $region51: #{tpu_custom_call.1} parent=43 // pred_region
          %295 = dma.done %s288, 1024
        $region52: #{tpu_custom_call.1} parent=43 // pred_fallthru
          _
        %s296 = sand.u32 %s48, 1
        %s297 = scalar_lea.sflag [#allocation4], %s296
        %s298 = sand.u32 %s48, 1
        %s299 = smul.addr %s298, 8
        %s300 = scalar_lea.vmem [#allocation3], %s299
        %p301 = pneg %p61
        %p302 = pneg %p58
        %s303 = sand.u32 %s74, 1
        %s304 = scalar_lea.sflag [#allocation7], %s303
        %s305 = sand.u32 %s74, 1
        %s306 = smul.addr %s305, 64
        %s307 = scalar_lea.vmem [#allocation6], %s306
        %p308 = pneg %p87
        %p309 = pneg %p84
        %p310 = pneg %p108
        %p311 = pneg %p105
        %p312 = pneg %p129
        %p313 = pneg %p126
        %p314 = pneg %p150
        %p315 = pneg %p147
        %p316 = pneg %p171
        %p317 = pneg %p168
        %p318 = pneg %p197
        %p319 = pneg %p194
        %s320 = sand.u32 %s184, 1
        %s321 = scalar_lea.sflag [#allocation5], %s320
        %s322 = sand.u32 %s184, 1
        %s323 = smul.addr %s322, 16
        %s324 = scalar_lea.vmem [#allocation8], %s323
        %s325 = smul.u32 16, %s31
        %p327 = scmp.eq.s32.totalorder %s31, 0
        // Predicated region
        $region53: #{tpu_custom_call.1} parent=43 // pred_check
          %p328 = pneg %p327
        $region54: #{tpu_custom_call.1} parent=43 // pred_check_branch
          %330 = sbr.rel (%p328) target = $region56
        $region55: #{tpu_custom_call.1} parent=43 // pred_region
          %331 = vst [vmem:[#allocation2] sm:$0xff] 0.0
          %332 = vst [vmem:[#allocation2 + $0x8] sm:$0xff] 0.0
        $region56: #{tpu_custom_call.1} parent=43 // pred_fallthru
          _
        %v333 = vld [vmem:[#allocation2] sm:$0xff]
        %v334 = vld [vmem:[#allocation2 + $0x8] sm:$0xff]
        %v335 = vld [vmem:[%s282] sm:$0xf]
        %v336 = vld [vmem:[%s282 + $0x4] sm:$0xf]
        %v337 = vld [vmem:[%s291] sm:$0xf]
        %v338 = vld [vmem:[%s291 + $0x4] sm:$0xf]
        %v339 = vld [vmem:[%s291 + $0x8] sm:$0xf]
        %v340 = vld [vmem:[%s291 + $0xc] sm:$0xf]
        %v341 = vld [vmem:[%s291 + $0x10] sm:$0xf]
        %v342 = vld [vmem:[%s291 + $0x14] sm:$0xf]
        %v343 = vld [vmem:[%s291 + $0x18] sm:$0xf]
        %v344 = vld [vmem:[%s291 + $0x1c] sm:$0xf]
        %v345 = vld [vmem:[%s291 + $0x20] sm:$0xf]
        %v346 = vld [vmem:[%s291 + $0x24] sm:$0xf]
        %v347 = vld [vmem:[%s291 + $0x28] sm:$0xf]
        %v348 = vld [vmem:[%s291 + $0x2c] sm:$0xf]
        %v349 = vld [vmem:[%s291 + $0x30] sm:$0xf]
        %v350 = vld [vmem:[%s291 + $0x34] sm:$0xf]
        %v351 = vld [vmem:[%s291 + $0x38] sm:$0xf]
        %v352 = vld [vmem:[%s291 + $0x3c] sm:$0xf]
        %v355 = vunpack.c.l.b16 %v335
        %v356 = vunpack.c.l.b16 %v336
        %v357 = vpack.c.b16 %v356, %v355
        %v375 = vunpack.c.l.b16 %v337
        %v376 = vunpack.c.l.b16 %v338
        %v377 = vunpack.c.l.b16 %v339
        %v378 = vunpack.c.l.b16 %v340
        %v379 = vunpack.c.l.b16 %v341
        %v380 = vunpack.c.l.b16 %v342
        %v381 = vunpack.c.l.b16 %v343
        %v382 = vunpack.c.l.b16 %v344
        %v383 = vunpack.c.l.b16 %v345
        %v384 = vunpack.c.l.b16 %v346
        %v385 = vunpack.c.l.b16 %v347
        %v386 = vunpack.c.l.b16 %v348
        %v387 = vunpack.c.l.b16 %v349
        %v388 = vunpack.c.l.b16 %v350
        %v389 = vunpack.c.l.b16 %v351
        %v390 = vunpack.c.l.b16 %v352
        %v391 = vpack.c.b16 %v376, %v375
        %v392 = vpack.c.b16 %v378, %v377
        %v393 = vpack.c.b16 %v380, %v379
        %v394 = vpack.c.b16 %v382, %v381
        %v395 = vpack.c.b16 %v384, %v383
        %v396 = vpack.c.b16 %v386, %v385
        %v397 = vpack.c.b16 %v388, %v387
        %v398 = vpack.c.b16 %v390, %v389
        %407 = vmatprep.subr.bf16.mxu0 0
        %408 = vmatpush1.bf16.msra.mxu0 %v391
        %409 = vmatprep.subr.bf16.mxu0 0
        %410 = vmatpush1.bf16.msra.mxu0 %v392
        %411 = vmatprep.subr.bf16.mxu0 0
        %412 = vmatpush1.bf16.msra.mxu0 %v393
        %413 = vmatprep.subr.bf16.mxu0 0
        %414 = vmatpush1.bf16.msra.mxu0 %v394
        %415 = vmatprep.subr.bf16.mxu0 0
        %416 = vmatpush1.bf16.msra.mxu0 %v395
        %417 = vmatprep.subr.bf16.mxu0 0
        %418 = vmatpush1.bf16.msra.mxu0 %v396
        %419 = vmatprep.subr.bf16.mxu0 0
        %420 = vmatpush1.bf16.msra.mxu0 %v397
        %421 = vmatprep.subr.bf16.mxu0 0
        %422 = vmatpush1.bf16.msra.mxu0 %v398
        %423 = vmatprep.subr.bf16.mxu0 0
        %424 = vmatpush1.bf16.msra.mxu0 0
        %425 = vmatprep.subr.bf16.mxu0 0
        %426 = vmatpush1.bf16.msra.mxu0 0
        %427 = vmatprep.subr.bf16.mxu0 0
        %428 = vmatpush1.bf16.msra.mxu0 0
        %429 = vmatprep.subr.bf16.mxu0 0
        %430 = vmatpush1.bf16.msra.mxu0 0
        %431 = vmatprep.subr.bf16.mxu0 0
        %432 = vmatpush1.bf16.msra.mxu0 0
        %433 = vmatprep.subr.bf16.mxu0 0
        %434 = vmatpush1.bf16.msra.mxu0 0
        %435 = vmatprep.subr.bf16.mxu0 0
        %436 = vmatpush1.bf16.msra.mxu0 0
        %437 = vmatprep.subr.bf16.mxu0 0
        %438 = vmatpush1.bf16.msra.mxu0 0
        %439 = vmatprep.mubr.bf16.mxu0 0
        %440 = vmatmul.mubr.bf16.gmra.mrb[0].mxu0 %v357
        %v441 = vpop.f32.mrb[0].mxu0
        %v442 = vadd.f32 0.0, %v441
        %v443 = vpop.f32.mrb[0].mxu0
        %v444 = vpop.f32.mrb[0].mxu0
        %v445 = vadd.f32 0.0, %v444
        %v446 = vpop.f32.mrb[0].mxu0
        %447 = vdwg.mxu0
        %v448 = vadd.f32 %v333, %v442
        %v449 = vadd.f32 %v334, %v445
        %450 = vst [vmem:[#allocation2] sm:$0xff] %v448
        %451 = vst [vmem:[#allocation2 + $0x8] sm:$0xff] %v449
        %p452 = scmp.eq.s32.totalorder %s31, 1
        // Predicated region
        $region57: #{tpu_custom_call.1} parent=43 // pred_check
          %p453 = pneg %p452
        $region58: #{tpu_custom_call.1} parent=43 // pred_check_branch
          %455 = sbr.rel (%p453) target = $region60
        $region59: #{tpu_custom_call.1} parent=43 // pred_region
          %v456 = vld [vmem:[#allocation2] sm:$0xff]
          %v457 = vld [vmem:[#allocation2 + $0x8] sm:$0xff]
          %v458 = vpack.c.bf16 %v457, %v456
          %v459 = vld [vmem:[%s2] sm:$0xf]
          %v460 = vld [vmem:[%s2 + $0x4] sm:$0xf]
          %v461 = vld [vmem:[%s3] sm:$0xff]
          %v462 = vld [vmem:[%s3 + $0x8] sm:$0xff]
          %464 = vset.pattern.permute.xlu0 0
          %465 = vperm.xlu0 %464, %v461
          %v466 = vpop.permute.xlu0 %465
          %469 = vset.pattern.permute.xlu0 0
          %470 = vperm.xlu0 %469, %v462
          %v471 = vpop.permute.xlu0 %470
          %v475 = vunpack.c.l.b16 %v459
          %v476 = vunpack.c.l.b16 %v460
          %v477 = vpack.c.b16 %v476, %v475
          %vm478 = vcmask 130048
          %v480 = vsel %vm478, %v477, 0
          %482 = vmatprep.subr.bf16.mxu0 0
          %483 = vmatpush1.bf16.msra.mxu0 %v458
          %484 = vmatprep.subr.bf16.mxu0 0
          %485 = vmatpush1.bf16.msra.mxu0 0
          %486 = vmatprep.subr.bf16.mxu0 0
          %487 = vmatpush1.bf16.msra.mxu0 0
          %488 = vmatprep.subr.bf16.mxu0 0
          %489 = vmatpush1.bf16.msra.mxu0 0
          %490 = vmatprep.subr.bf16.mxu0 0
          %491 = vmatpush1.bf16.msra.mxu0 0
          %492 = vmatprep.subr.bf16.mxu0 0
          %493 = vmatpush1.bf16.msra.mxu0 0
          %494 = vmatprep.subr.bf16.mxu0 0
          %495 = vmatpush1.bf16.msra.mxu0 0
          %496 = vmatprep.subr.bf16.mxu0 0
          %497 = vmatpush1.bf16.msra.mxu0 0
          %498 = vmatprep.subr.bf16.mxu0 0
          %499 = vmatpush1.bf16.msra.mxu0 0
          %500 = vmatprep.subr.bf16.mxu0 0
          %501 = vmatpush1.bf16.msra.mxu0 0
          %502 = vmatprep.subr.bf16.mxu0 0
          %503 = vmatpush1.bf16.msra.mxu0 0
          %504 = vmatprep.subr.bf16.mxu0 0
          %505 = vmatpush1.bf16.msra.mxu0 0
          %506 = vmatprep.subr.bf16.mxu0 0
          %507 = vmatpush1.bf16.msra.mxu0 0
          %508 = vmatprep.subr.bf16.mxu0 0
          %509 = vmatpush1.bf16.msra.mxu0 0
          %510 = vmatprep.subr.bf16.mxu0 0
          %511 = vmatpush1.bf16.msra.mxu0 0
          %512 = vmatprep.subr.bf16.mxu0 0
          %513 = vmatpush1.bf16.msra.mxu0 0
          %514 = vmatprep.mubr.bf16.mxu0 0
          %515 = vmatmul.mubr.bf16.gmra.mrb[0].mxu0 %v480
          %v516 = vpop.f32.mrb[0].mxu0
          %v517 = vadd.f32 %v466, %v516
          %v518 = vpop.f32.mrb[0].mxu0
          %v519 = vpop.f32.mrb[0].mxu0
          %v520 = vadd.f32 %v471, %v519
          %v521 = vpop.f32.mrb[0].mxu0
          %522 = vdwg.mxu0
          %v523 = vmax.f32 %v517, 0.0
          %v524 = vmax.f32 %v520, 0.0
          %v525 = vld [vmem:[%s4] sm:$0xff]
          %v526 = vld [vmem:[%s4 + $0x8] sm:$0xff]
          %v527 = vmul.f32 %v523, %v525
          %v528 = vmul.f32 %v524, %v526
          %v529 = vld [vmem:[%s5] sm:$0xf]
          %v530 = vld [vmem:[%s5 + $0x4] sm:$0xf]
          %v531 = vpack.c.bf16 %v528, %v527
          %v534 = vunpack.c.l.b16 %v529
          %v535 = vunpack.c.l.b16 %v530
          %v536 = vpack.c.b16 %v535, %v534
          %v538 = vsel %vm478, %v536, 0
          %540 = vmatprep.subr.bf16.mxu0 0
          %541 = vmatpush1.bf16.msra.mxu0 %v531
          %542 = vmatprep.subr.bf16.mxu0 0
          %543 = vmatpush1.bf16.msra.mxu0 0
          %544 = vmatprep.subr.bf16.mxu0 0
          %545 = vmatpush1.bf16.msra.mxu0 0
          %546 = vmatprep.subr.bf16.mxu0 0
          %547 = vmatpush1.bf16.msra.mxu0 0
          %548 = vmatprep.subr.bf16.mxu0 0
          %549 = vmatpush1.bf16.msra.mxu0 0
          %550 = vmatprep.subr.bf16.mxu0 0
          %551 = vmatpush1.bf16.msra.mxu0 0
          %552 = vmatprep.subr.bf16.mxu0 0
          %553 = vmatpush1.bf16.msra.mxu0 0
          %554 = vmatprep.subr.bf16.mxu0 0
          %555 = vmatpush1.bf16.msra.mxu0 0
          %556 = vmatprep.subr.bf16.mxu0 0
          %557 = vmatpush1.bf16.msra.mxu0 0
          %558 = vmatprep.subr.bf16.mxu0 0
          %559 = vmatpush1.bf16.msra.mxu0 0
          %560 = vmatprep.subr.bf16.mxu0 0
          %561 = vmatpush1.bf16.msra.mxu0 0
          %562 = vmatprep.subr.bf16.mxu0 0
          %563 = vmatpush1.bf16.msra.mxu0 0
          %564 = vmatprep.subr.bf16.mxu0 0
          %565 = vmatpush1.bf16.msra.mxu0 0
          %566 = vmatprep.subr.bf16.mxu0 0
          %567 = vmatpush1.bf16.msra.mxu0 0
          %568 = vmatprep.subr.bf16.mxu0 0
          %569 = vmatpush1.bf16.msra.mxu0 0
          %570 = vmatprep.subr.bf16.mxu0 0
          %571 = vmatpush1.bf16.msra.mxu0 0
          %572 = vmatprep.mubr.bf16.mxu0 0
          %573 = vmatmul.mubr.bf16.gmra.mrb[0].mxu0 %v538
          %v574 = vpop.f32.mrb[0].mxu0
          %v575 = vadd.f32 0.0, %v574
          %v576 = vpop.f32.mrb[0].mxu0
          %v577 = vpop.f32.mrb[0].mxu0
          %v578 = vadd.f32 0.0, %v577
          %v579 = vpop.f32.mrb[0].mxu0
          %580 = vdwg.mxu0
          %581 = vst [vmem:[%s324] sm:$0xff] %v575
          %582 = vst [vmem:[%s324 + $0x8] sm:$0xff] %v578
        $region60: #{tpu_custom_call.1} parent=43 // pred_fallthru
          _
        %s583 = sand.u32 %s184, 1
        %s584 = scalar_lea.sflag [#allocation5], %s583
        %s585 = sand.u32 %s184, 1
        %s586 = smul.addr %s585, 16
        %s587 = scalar_lea.vmem [#allocation8], %s586
        // Predicated region
        $region61: #{tpu_custom_call.1} parent=43 // pred_check
          %p588 = pneg %p194
        $region62: #{tpu_custom_call.1} parent=43 // pred_check_branch
          %590 = sbr.rel (%p588) target = $region64
        $region63: #{tpu_custom_call.1} parent=43 // pred_region
          %s592 = ssub.s32 256, 256
          %593 = vsyncadd %s584, %s592
          %s594 = smul.addr %s30, 2
          %s595 = smul.addr %s594, 128
          %s596 = scalar_lea.hbm %s6, %s595
          %s597 = sshll.u32 %s587, 4
          %s598 = int_to_ptr.vmem [resolvable:$true] %s597
          %603 = dma.vmem_to_hbm [thread:$0]  %s598, 256, %s596, %s584, 128, 128, 8
        $region64: #{tpu_custom_call.1} parent=43 // pred_fallthru
          _
      $region44: #{tpu_custom_call.1} parent=5 // pred_fallthru
        _
      %p604 = scmp.le.s32.totalorder 2, %s21
      // Predicated region
      $region65: #{tpu_custom_call.1} parent=5 // pred_check
        %p605 = pneg %p604
      $region66: #{tpu_custom_call.1} parent=5 // pred_check_branch
        %607 = sbr.rel (%p605) target = $region68
      $region67: #{tpu_custom_call.1} parent=5 // pred_region
        %s608 = ssub.s32 %s21, 2
        // Predicated region
        $region69: #{tpu_custom_call.1} parent=67 // pred_check
          %p609 = pneg %p200
        $region70: #{tpu_custom_call.1} parent=67 // pred_check_branch
          %611 = sbr.rel (%p609) target = $region72
        $region71: #{tpu_custom_call.1} parent=67 // pred_region
          %s612 = sand.u32 %s185, 1
          %s613 = scalar_lea.sflag [#allocation5], %s612
          %s614 = sand.u32 %s185, 1
          %s615 = smul.addr %s614, 16
          %s616 = scalar_lea.vmem [#allocation8], %s615
          %617 = dma.done %s613, 256
        $region72: #{tpu_custom_call.1} parent=67 // pred_fallthru
          _
      $region68: #{tpu_custom_call.1} parent=5 // pred_fallthru
        _
    $region6: #{tpu_custom_call.1} parent=1 // loop_footer
      %s25 = sadd.s32 1, %s21
    $region7: #{tpu_custom_call.1} parent=1 // loop_footer_branch
      %20 = sbr.rel target = $region3
    $region8: #{tpu_custom_call.1} parent=1 // loop_exit
      _
    %618 = vsyncpa [#allocation4], 1
    %s619 = scalar_lea.sflag [#allocation4], 1
    %620 = vsyncpa %s619, 1
    %621 = vsyncpa [#allocation7], 1
    %s622 = scalar_lea.sflag [#allocation7], 1
    %623 = vsyncpa %s622, 1
    %624 = vsyncpa [#allocation5], 1
    %s625 = scalar_lea.sflag [#allocation5], 1
    %626 = vsyncpa %s625, 1

</llo_original>
